<compile_context>
chip_gen: v7x
topology: tpu7x:2x2x1
jax: 0.10.0
libtpu: 0.0.40
codegen_flags: <defaults>
</compile_context>

<pallas_src>
import jax
import jax.numpy as jnp
from jax import lax
from jax.experimental import pallas as pl
from jax.experimental.pallas import tpu as pltpu

EMBED = 32           # embed_dim
HEADS = 8            # num_heads
HEAD_DIM = EMBED // HEADS
FF = 32              # dim_feedforward
LEN_SIZE = 30        # length_size (fc output width)
LN_EPS = 1e-5

SLOT = 128           # lane-aligned column slot width for the packed weight slab
WM_ROWS = EMBED      # 32 rows in the packed slab

# Packed slab layout: (WM_ROWS, N_WSLOTS*SLOT), every matmul operand starts at a
# lane offset that is a multiple of 128.
COL_FUSE = 0 * SLOT  # rows 0..C-1 : fused [Wp | Wp@Wq' | Wp@Wk | Wp@Wv] (C, 128)
COL_WO = 1 * SLOT    # (E, E)   attention out-proj
COL_W1 = 2 * SLOT    # (E, FF)  ff linear1
COL_W2 = 3 * SLOT    # (FF, E)  ff linear2
COL_FC = 4 * SLOT    # (E, 128) final fc, zero-padded from LEN_SIZE to 128 lanes
COL_POOL = 5 * SLOT  # (E, H)   head-pool matrix
COL_UNPOOL = 6 * SLOT  # (H, E) head-unpool matrix
N_WSLOTS = 7

# Bias / small-vector rows live in lanes 0..127 of slot 0, below the fused
# weight rows (rows 0..C-1).
R_TW = 8             # rows 8..10: depthwise conv taps (width C)
R_TB = 11            # conv bias (width C)
R_BFUSE = 12         # fused bias [bp | bq'' | bk' | bv'] (128 lanes)
R_BO = 13            # out-proj bias (E)
R_LN1W = 14
R_LN1B = 15
R_B1 = 16            # ff bias1 (FF)
R_B2 = 17            # ff bias2 (E)
R_LN2W = 18
R_LN2B = 19
R_BFC = 20           # fc bias, zero-padded to 128 lanes


def robformer_kernel(x_ref, wm_ref, out_ref):
    _, B, L, C = x_ref.shape
    BL = B * L

    x2 = x_ref[...].reshape(BL, C)                       # layout-preserving

    # ---- RobustDecomposition trend: depthwise Conv1d(k=3, pad=1) along L ----
    # Shift along L by rotating the flattened (B*L, C) rows (sublane rotation);
    # rows that wrap across batch boundaries / array ends are exactly the
    # conv's zero-padding positions, so mask them with a boundary predicate.
    l_pos = lax.broadcasted_iota(jnp.int32, (BL, C), 0) % L
    x_prev = jnp.where(l_pos == 0, 0.0, pltpu.roll(x2, 1, axis=0))
    x_next = jnp.where(l_pos == L - 1, 0.0, pltpu.roll(x2, BL - 1, axis=0))
    trend = (x_prev * wm_ref[R_TW + 0:R_TW + 1, 0:C]
             + x2 * wm_ref[R_TW + 1:R_TW + 2, 0:C]
             + x_next * wm_ref[R_TW + 2:R_TW + 3, 0:C]
             + wm_ref[R_TB:R_TB + 1, 0:C])               # (BL, C)

    # ---- fused input_projection + QKV: a single (C, 128) matmul -------------
    # lanes 0..31 = proj, 32..63 = q (scale pre-folded), 64..95 = k, 96..127 = v
    fused = (jnp.dot(trend, wm_ref[0:C, COL_FUSE:COL_FUSE + 4 * EMBED],
                     preferred_element_type=jnp.float32)
             + wm_ref[R_BFUSE:R_BFUSE + 1, 0:4 * EMBED])  # (BL, 128)
    proj = fused[:, 0:EMBED]                              # (BL, E)
    q = fused[:, EMBED:2 * EMBED].reshape(B, L, EMBED)
    k = fused[:, 2 * EMBED:3 * EMBED].reshape(B, L, EMBED)
    v = fused[:, 3 * EMBED:4 * EMBED].reshape(B, L, EMBED)

    # ---- multi-head self-attention over the B axis, all heads at once -------
    # Per-head Dh contractions use precomputed head-pool (E->H) / unpool (H->E)
    # matrices loaded from the slab (no per-head slices or masked reductions).
    pool = wm_ref[0:EMBED, COL_POOL:COL_POOL + HEADS]         # (E, H)
    unpool = wm_ref[0:HEADS, COL_UNPOOL:COL_UNPOOL + EMBED]   # (H, E)

    prod = q[:, None, :, :] * k[None, :, :, :]               # (B, B, L, E)
    scores = jnp.dot(prod.reshape(B * B * L, EMBED), pool,
                     preferred_element_type=jnp.float32).reshape(B, B, L, HEADS)
    m = jnp.max(scores, axis=1, keepdims=True)
    e = jnp.exp(scores - m)
    denom = jnp.sum(e, axis=1, keepdims=True)
    p = e * pl.reciprocal(denom, approx=True)                # (B, B, L, H)
    p_full = jnp.dot(p.reshape(B * B * L, HEADS), unpool,
                     preferred_element_type=jnp.float32).reshape(B, B, L, EMBED)
    ctx = jnp.sum(p_full * v[None, :, :, :], axis=1)         # (B, L, E)
    attn = (jnp.dot(ctx.reshape(BL, EMBED), wm_ref[:, COL_WO:COL_WO + EMBED],
                    preferred_element_type=jnp.float32)
            + wm_ref[R_BO:R_BO + 1, 0:EMBED])                # (BL, E)

    # ---- add & norm / feed-forward / add & norm ------------------------------
    def layer_norm(z, w, b):
        # Two independent reductions (overlap on the XLU); biased variance.
        mean = jnp.mean(z, axis=-1, keepdims=True)
        ex2 = jnp.mean(z * z, axis=-1, keepdims=True)
        var = jnp.maximum(ex2 - mean * mean, 0.0)
        return (z - mean) * lax.rsqrt(var + LN_EPS) * w + b

    h1 = layer_norm(proj + attn,
                    wm_ref[R_LN1W:R_LN1W + 1, 0:EMBED],
                    wm_ref[R_LN1B:R_LN1B + 1, 0:EMBED])
    ff = (jnp.dot(h1, wm_ref[:, COL_W1:COL_W1 + FF],
                  preferred_element_type=jnp.float32)
          + wm_ref[R_B1:R_B1 + 1, 0:FF])
    ff = jnp.maximum(ff, 0.0)
    ff = (jnp.dot(ff, wm_ref[0:FF, COL_W2:COL_W2 + EMBED],
                  preferred_element_type=jnp.float32)
          + wm_ref[R_B2:R_B2 + 1, 0:EMBED])
    h2 = layer_norm(h1 + ff,
                    wm_ref[R_LN2W:R_LN2W + 1, 0:EMBED],
                    wm_ref[R_LN2B:R_LN2B + 1, 0:EMBED])

    # ---- trend_encoded[:, -1, :] (last index of L), then lane-padded fc -----
    sel = h2.reshape(B, L, EMBED)[:, L - 1, :]               # (B, E)
    out = (jnp.dot(sel, wm_ref[:, COL_FC:COL_FC + SLOT],
                   preferred_element_type=jnp.float32)
           + wm_ref[R_BFC:R_BFC + 1, 0:SLOT])                # (B, 128); cols >= 30 are 0
    out_ref[...] = out.reshape(1, B, SLOT)


def init_params(key, n_features):
    ks = jax.random.split(key, 18)

    def rnd(k, shape, scale=0.1):
        return jax.random.normal(k, shape, jnp.float32) * scale

    p = {}
    # RobustDecomposition.trend_conv (depthwise): weight (C,1,3) stored as (3,C)
    p["tw"] = rnd(ks[0], (3, n_features))
    p["tb"] = rnd(ks[1], (1, n_features))
    # input_projection: Linear(C, E) stored transposed (C, E)
    p["wp"] = rnd(ks[2], (n_features, EMBED))
    p["bp"] = rnd(ks[3], (1, EMBED))
    # MultiheadAttention in_proj (q/k/v, stored transposed (E, E))
    p["wq"] = rnd(ks[4], (EMBED, EMBED))
    p["wk"] = rnd(ks[5], (EMBED, EMBED))
    p["wv"] = rnd(ks[6], (EMBED, EMBED))
    p["bq"] = rnd(ks[7], (1, EMBED))
    p["bk"] = rnd(ks[8], (1, EMBED))
    p["bv"] = rnd(ks[9], (1, EMBED))
    # attention out_proj
    p["wo"] = rnd(ks[10], (EMBED, EMBED))
    p["bo"] = rnd(ks[11], (1, EMBED))
    # LayerNorms (PyTorch default init)
    p["ln1w"] = jnp.ones((1, EMBED), jnp.float32)
    p["ln1b"] = jnp.zeros((1, EMBED), jnp.float32)
    p["ln2w"] = jnp.ones((1, EMBED), jnp.float32)
    p["ln2b"] = jnp.zeros((1, EMBED), jnp.float32)
    # feed-forward
    p["w1"] = rnd(ks[12], (EMBED, FF))
    p["b1"] = rnd(ks[13], (1, FF))
    p["w2"] = rnd(ks[14], (FF, EMBED))
    p["b2"] = rnd(ks[15], (1, EMBED))
    # final fc: Linear(E, LEN_SIZE)
    p["wfc"] = rnd(ks[16], (EMBED, LEN_SIZE))
    p["bfc"] = rnd(ks[17], (1, LEN_SIZE))
    return p


def pack_params(p, n_features):
    """Pack all parameters into ONE weight/bias slab (WM_ROWS, N_WSLOTS*SLOT)."""
    C = n_features
    assert C <= 8 and FF <= EMBED and LEN_SIZE <= SLOT and 4 * EMBED == SLOT

    scale = 1.0 / float(HEAD_DIM) ** 0.5
    # Fold the attention scale into Wq / bq host-side.
    wqkv = jnp.concatenate([p["wq"] * scale, p["wk"], p["wv"]], axis=1)   # (E, 3E)
    bqkv = jnp.concatenate([p["bq"] * scale, p["bk"], p["bv"]], axis=1)   # (1, 3E)
    # Fuse input_projection with the QKV projection:
    #   proj = t@Wp + bp ;  qkv = proj@Wqkv + bqkv = t@(Wp@Wqkv) + (bp@Wqkv + bqkv)
    w_fused = jnp.concatenate([p["wp"], p["wp"] @ wqkv], axis=1)          # (C, 4E)
    b_fused = jnp.concatenate([p["bp"], p["bp"] @ wqkv + bqkv], axis=1)   # (1, 4E)

    # Head pool/unpool constants (precomputed host-side).
    e_idx = jnp.arange(EMBED)
    h_idx = jnp.arange(HEADS)
    pool = (e_idx[:, None] // HEAD_DIM == h_idx[None, :]).astype(jnp.float32)  # (E,H)
    unpool = pool.T                                                             # (H,E)

    wm = jnp.zeros((WM_ROWS, N_WSLOTS * SLOT), jnp.float32)
    wm = wm.at[0:C, COL_FUSE:COL_FUSE + 4 * EMBED].set(w_fused)
    wm = wm.at[:, COL_WO:COL_WO + EMBED].set(p["wo"])
    wm = wm.at[:, COL_W1:COL_W1 + FF].set(p["w1"])
    wm = wm.at[0:FF, COL_W2:COL_W2 + EMBED].set(p["w2"])
    wm = wm.at[:, COL_FC:COL_FC + LEN_SIZE].set(p["wfc"])
    wm = wm.at[0:EMBED, COL_POOL:COL_POOL + HEADS].set(pool)
    wm = wm.at[0:HEADS, COL_UNPOOL:COL_UNPOOL + EMBED].set(unpool)

    # Bias / vector rows (slot 0, rows 8..20).
    wm = wm.at[R_TW:R_TW + 3, 0:C].set(p["tw"])
    wm = wm.at[R_TB, 0:C].set(p["tb"][0])
    wm = wm.at[R_BFUSE, 0:4 * EMBED].set(b_fused[0])
    wm = wm.at[R_BO, 0:EMBED].set(p["bo"][0])
    wm = wm.at[R_LN1W, 0:EMBED].set(p["ln1w"][0])
    wm = wm.at[R_LN1B, 0:EMBED].set(p["ln1b"][0])
    wm = wm.at[R_B1, 0:FF].set(p["b1"][0])
    wm = wm.at[R_B2, 0:EMBED].set(p["b2"][0])
    wm = wm.at[R_LN2W, 0:EMBED].set(p["ln2w"][0])
    wm = wm.at[R_LN2B, 0:EMBED].set(p["ln2b"][0])
    wm = wm.at[R_BFC, 0:LEN_SIZE].set(p["bfc"][0])
    return wm


@jax.jit
def robformer_forward_batched(xs, wm):
    """Run N independent Robformer forwards in one gridded pallas_call.

    xs: (N, B, L, C) float32; returns (N, B, LEN_SIZE)."""
    N, B, L, C = xs.shape
    out_padded = pl.pallas_call(
        robformer_kernel,
        out_shape=jax.ShapeDtypeStruct((N, B, SLOT), jnp.float32),
        grid=(N,),
        in_specs=[
            pl.BlockSpec((1, B, L, C), lambda n: (n, 0, 0, 0)),
            # Constant block index -> weight slab DMA'd once, stays VMEM-resident.
            pl.BlockSpec((WM_ROWS, N_WSLOTS * SLOT), lambda n: (0, 0)),
        ],
        out_specs=pl.BlockSpec((1, B, SLOT), lambda n: (n, 0, 0)),
        compiler_params=pltpu.CompilerParams(
            dimension_semantics=("parallel",)),
    )(xs, wm)
    # fc output was lane-padded to 128 inside the kernel; slice to length_size.
    return out_padded[:, :, :LEN_SIZE]


@jax.jit
def robformer_forward(x, wm):
    """Single-call forward, matching the PyTorch module: x (B, L, C) -> (B, LEN_SIZE)."""
    return robformer_forward_batched(x[None], wm)[0]


if __name__ == "__main__":
    key = jax.random.PRNGKey(0)
    kx, kp = jax.random.split(key)
    B, L, C = 2, 8, 4           # batch=2, seq_len=8, n_features=4
    N_CALLS = 4                 # independent forwards amortized over one grid

    xs = jax.random.normal(kx, (N_CALLS, B, L, C), jnp.float32)
    params = init_params(kp, C)
    wm = pack_params(params, C)

    outs = robformer_forward_batched(xs, wm)      # (N, B, LEN_SIZE)
    out1 = robformer_forward(xs[0], wm)           # (B, LEN_SIZE)
    jax.block_until_ready((outs, out1))

    assert outs.shape == (N_CALLS, B, LEN_SIZE) and outs.dtype == jnp.float32
    assert out1.shape == (B, LEN_SIZE) and out1.dtype == jnp.float32
    print("KERNEL_OK")
</pallas_src>

<mosaic_0001>
module attributes {stable_mosaic.version = 11 : i64} {
  func.func @robformer_kernel(%arg0: i32, %arg1: memref<1x2x8x4xf32, #tpu.memory_space<vmem>>, %arg2: memref<32x896xf32, #tpu.memory_space<vmem>>, %arg3: memref<1x2x128xf32, #tpu.memory_space<vmem>>) attributes {dimension_semantics = [#tpu.dimension_semantics<parallel>], iteration_bounds = array<i64: 4>, scalar_prefetch = 0 : i64, scratch_operands = 0 : i64, tpu.core_type = #tpu.core_type<tc>, window_params = [{transform_indices = @transform_0, window_bounds = array<i64: 1, 2, 8, 4>}, {pipeline_mode = #tpu.pipeline_mode<synchronous>, transform_indices = @transform_1, window_bounds = array<i64: 32, 896>}, {transform_indices = @transform_2, window_bounds = array<i64: 1, 2, 128>}]} {
    %c0 = arith.constant 0 : index
    %c0_0 = arith.constant 0 : index
    %c0_1 = arith.constant 0 : index
    %c0_2 = arith.constant 0 : index
    %0 = vector.load %arg1[%c0, %c0_0, %c0_1, %c0_2] : memref<1x2x8x4xf32, #tpu.memory_space<vmem>>, vector<1x2x8x4xf32>
    %1 = vector.shape_cast %0 : vector<1x2x8x4xf32> to vector<16x4xf32>
    %2 = tpu.iota {dimensions = array<i32: 0>} : vector<16x4xi32>
    %c8_i32 = arith.constant 8 : i32
    %c0_i32 = arith.constant 0 : i32
    %3 = arith.cmpi eq, %c8_i32, %c0_i32 : i32
    %c1_i32 = arith.constant 1 : i32
    %4 = arith.select %3, %c1_i32, %c8_i32 : i32
    %5 = vector.broadcast %4 : i32 to vector<16x4xi32>
    %6 = arith.remsi %2, %5 : vector<16x4xi32>
    %c0_i32_3 = arith.constant 0 : i32
    %7 = vector.broadcast %c0_i32_3 : i32 to vector<16x4xi32>
    %8 = arith.cmpi ne, %6, %7 : vector<16x4xi32>
    %c0_i32_4 = arith.constant 0 : i32
    %9 = vector.broadcast %c0_i32_4 : i32 to vector<16x4xi32>
    %10 = arith.cmpi slt, %6, %9 : vector<16x4xi32>
    %c0_i32_5 = arith.constant 0 : i32
    %11 = arith.cmpi slt, %4, %c0_i32_5 : i32
    %12 = vector.broadcast %11 : i1 to vector<16x4xi1>
    %13 = vector.broadcast %12 : vector<16x4xi1> to vector<16x4xi1>
    %14 = arith.xori %10, %13 : vector<16x4xi1>
    %15 = arith.andi %14, %8 : vector<16x4xi1>
    %16 = vector.broadcast %4 : i32 to vector<16x4xi32>
    %17 = arith.addi %6, %16 : vector<16x4xi32>
    %18 = arith.select %15, %17, %6 : vector<16x4xi1>, vector<16x4xi32>
    %c0_i32_6 = arith.constant 0 : i32
    %19 = vector.broadcast %c0_i32_6 : i32 to vector<16x4xi32>
    %20 = arith.cmpi eq, %18, %19 : vector<16x4xi32>
    %c1_i32_7 = arith.constant 1 : i32
    %21 = tpu.dynamic_rotate %1 by %c1_i32_7 dim 0 : vector<16x4xf32>, i32 -> vector<16x4xf32>
    %cst = arith.constant 0.000000e+00 : f32
    %22 = vector.broadcast %cst : f32 to vector<16x4xf32>
    %23 = arith.select %20, %22, %21 : vector<16x4xi1>, vector<16x4xf32>
    %c7_i32 = arith.constant 7 : i32
    %24 = vector.broadcast %c7_i32 : i32 to vector<16x4xi32>
    %25 = arith.cmpi eq, %18, %24 : vector<16x4xi32>
    %c15_i32 = arith.constant 15 : i32
    %26 = tpu.dynamic_rotate %1 by %c15_i32 dim 0 : vector<16x4xf32>, i32 -> vector<16x4xf32>
    %cst_8 = arith.constant 0.000000e+00 : f32
    %27 = vector.broadcast %cst_8 : f32 to vector<16x4xf32>
    %28 = arith.select %25, %27, %26 : vector<16x4xi1>, vector<16x4xf32>
    %c8 = arith.constant 8 : index
    %c0_9 = arith.constant 0 : index
    %29 = vector.load %arg2[%c8, %c0_9] : memref<32x896xf32, #tpu.memory_space<vmem>>, vector<1x4xf32>
    %30 = vector.broadcast %29 : vector<1x4xf32> to vector<16x4xf32>
    %31 = arith.mulf %23, %30 : vector<16x4xf32>
    %c9 = arith.constant 9 : index
    %c0_10 = arith.constant 0 : index
    %32 = vector.load %arg2[%c9, %c0_10] : memref<32x896xf32, #tpu.memory_space<vmem>>, vector<1x4xf32>
    %33 = vector.broadcast %32 : vector<1x4xf32> to vector<16x4xf32>
    %34 = arith.mulf %1, %33 : vector<16x4xf32>
    %35 = arith.addf %31, %34 : vector<16x4xf32>
    %c10 = arith.constant 10 : index
    %c0_11 = arith.constant 0 : index
    %36 = vector.load %arg2[%c10, %c0_11] : memref<32x896xf32, #tpu.memory_space<vmem>>, vector<1x4xf32>
    %37 = vector.broadcast %36 : vector<1x4xf32> to vector<16x4xf32>
    %38 = arith.mulf %28, %37 : vector<16x4xf32>
    %39 = arith.addf %35, %38 : vector<16x4xf32>
    %c11 = arith.constant 11 : index
    %c0_12 = arith.constant 0 : index
    %40 = vector.load %arg2[%c11, %c0_12] : memref<32x896xf32, #tpu.memory_space<vmem>>, vector<1x4xf32>
    %41 = vector.broadcast %40 : vector<1x4xf32> to vector<16x4xf32>
    %42 = arith.addf %39, %41 : vector<16x4xf32>
    %c0_13 = arith.constant 0 : index
    %c0_14 = arith.constant 0 : index
    %43 = vector.load %arg2[%c0_13, %c0_14] : memref<32x896xf32, #tpu.memory_space<vmem>>, vector<4x128xf32>
    %cst_15 = arith.constant dense<0.000000e+00> : vector<16x128xf32>
    %44 = tpu.matmul %42, %43, %cst_15 {dimension_numbers = #tpu.dot_dimension_numbers<[1], [0], [0], [1], [0, 0, 1, 1], [], []>} : vector<16x4xf32>, vector<4x128xf32>, vector<16x128xf32> -> vector<16x128xf32>
    %c12 = arith.constant 12 : index
    %c0_16 = arith.constant 0 : index
    %45 = vector.load %arg2[%c12, %c0_16] : memref<32x896xf32, #tpu.memory_space<vmem>>, vector<1x128xf32>
    %46 = vector.broadcast %45 : vector<1x128xf32> to vector<16x128xf32>
    %47 = arith.addf %44, %46 : vector<16x128xf32>
    %48 = vector.extract_strided_slice %47 {offsets = [0, 0], sizes = [16, 32], strides = [1, 1]} : vector<16x128xf32> to vector<16x32xf32>
    %49 = vector.extract_strided_slice %47 {offsets = [0, 32], sizes = [16, 32], strides = [1, 1]} : vector<16x128xf32> to vector<16x32xf32>
    %50 = vector.shape_cast %49 : vector<16x32xf32> to vector<2x8x32xf32>
    %51 = vector.extract_strided_slice %47 {offsets = [0, 64], sizes = [16, 32], strides = [1, 1]} : vector<16x128xf32> to vector<16x32xf32>
    %52 = vector.shape_cast %51 : vector<16x32xf32> to vector<2x8x32xf32>
    %53 = vector.extract_strided_slice %47 {offsets = [0, 96], sizes = [16, 32], strides = [1, 1]} : vector<16x128xf32> to vector<16x32xf32>
    %54 = vector.shape_cast %53 : vector<16x32xf32> to vector<2x8x32xf32>
    %c0_17 = arith.constant 0 : index
    %c640 = arith.constant 640 : index
    %55 = vector.load %arg2[%c0_17, %c640] : memref<32x896xf32, #tpu.memory_space<vmem>>, vector<32x8xf32>
    %c0_18 = arith.constant 0 : index
    %c768 = arith.constant 768 : index
    %56 = vector.load %arg2[%c0_18, %c768] : memref<32x896xf32, #tpu.memory_space<vmem>>, vector<8x32xf32>
    %57 = vector.shape_cast %50 : vector<2x8x32xf32> to vector<2x1x8x32xf32>
    %58 = vector.shape_cast %52 : vector<2x8x32xf32> to vector<1x2x8x32xf32>
    %59 = vector.broadcast %57 : vector<2x1x8x32xf32> to vector<2x2x8x32xf32>
    %60 = vector.broadcast %58 : vector<1x2x8x32xf32> to vector<2x2x8x32xf32>
    %61 = arith.mulf %59, %60 : vector<2x2x8x32xf32>
    %62 = vector.shape_cast %61 : vector<2x2x8x32xf32> to vector<32x32xf32>
    %cst_19 = arith.constant dense<0.000000e+00> : vector<32x8xf32>
    %63 = tpu.matmul %62, %55, %cst_19 {dimension_numbers = #tpu.dot_dimension_numbers<[1], [0], [0], [1], [0, 0, 1, 1], [], []>} : vector<32x32xf32>, vector<32x8xf32>, vector<32x8xf32> -> vector<32x8xf32>
    %64 = vector.shape_cast %63 : vector<32x8xf32> to vector<2x2x8x8xf32>
    %cst_20 = arith.constant dense<0xFF800000> : vector<2x8x8xf32>
    %65 = vector.multi_reduction <maximumf>, %64, %cst_20 [1] : vector<2x2x8x8xf32> to vector<2x8x8xf32>
    %66 = vector.shape_cast %65 : vector<2x8x8xf32> to vector<2x1x8x8xf32>
    %67 = vector.broadcast %66 : vector<2x1x8x8xf32> to vector<2x2x8x8xf32>
    %68 = arith.subf %64, %67 : vector<2x2x8x8xf32>
    %69 = math.exp %68 : vector<2x2x8x8xf32>
    %cst_21 = arith.constant dense<0.000000e+00> : vector<2x8x8xf32>
    %70 = vector.multi_reduction <add>, %69, %cst_21 [1] : vector<2x2x8x8xf32> to vector<2x8x8xf32>
    %71 = vector.shape_cast %70 : vector<2x8x8xf32> to vector<2x1x8x8xf32>
    %72 = tpu.reciprocal %71 {approx = true} : vector<2x1x8x8xf32> -> vector<2x1x8x8xf32>
    %73 = vector.broadcast %72 : vector<2x1x8x8xf32> to vector<2x2x8x8xf32>
    %74 = arith.mulf %69, %73 : vector<2x2x8x8xf32>
    %75 = vector.shape_cast %74 : vector<2x2x8x8xf32> to vector<32x8xf32>
    %cst_22 = arith.constant dense<0.000000e+00> : vector<32x32xf32>
    %76 = tpu.matmul %75, %56, %cst_22 {dimension_numbers = #tpu.dot_dimension_numbers<[1], [0], [0], [1], [0, 0, 1, 1], [], []>} : vector<32x8xf32>, vector<8x32xf32>, vector<32x32xf32> -> vector<32x32xf32>
    %77 = vector.shape_cast %76 : vector<32x32xf32> to vector<2x2x8x32xf32>
    %78 = vector.shape_cast %54 : vector<2x8x32xf32> to vector<1x2x8x32xf32>
    %79 = vector.broadcast %78 : vector<1x2x8x32xf32> to vector<2x2x8x32xf32>
    %80 = arith.mulf %77, %79 : vector<2x2x8x32xf32>
    %cst_23 = arith.constant dense<0.000000e+00> : vector<2x8x32xf32>
    %81 = vector.multi_reduction <add>, %80, %cst_23 [1] : vector<2x2x8x32xf32> to vector<2x8x32xf32>
    %82 = vector.shape_cast %81 : vector<2x8x32xf32> to vector<16x32xf32>
    %c0_24 = arith.constant 0 : index
    %c128 = arith.constant 128 : index
    %83 = vector.load %arg2[%c0_24, %c128] : memref<32x896xf32, #tpu.memory_space<vmem>>, vector<32x32xf32>
    %cst_25 = arith.constant dense<0.000000e+00> : vector<16x32xf32>
    %84 = tpu.matmul %82, %83, %cst_25 {dimension_numbers = #tpu.dot_dimension_numbers<[1], [0], [0], [1], [0, 0, 1, 1], [], []>} : vector<16x32xf32>, vector<32x32xf32>, vector<16x32xf32> -> vector<16x32xf32>
    %c13 = arith.constant 13 : index
    %c0_26 = arith.constant 0 : index
    %85 = vector.load %arg2[%c13, %c0_26] : memref<32x896xf32, #tpu.memory_space<vmem>>, vector<1x32xf32>
    %86 = vector.broadcast %85 : vector<1x32xf32> to vector<16x32xf32>
    %87 = arith.addf %84, %86 : vector<16x32xf32>
    %88 = arith.addf %48, %87 : vector<16x32xf32>
    %c14 = arith.constant 14 : index
    %c0_27 = arith.constant 0 : index
    %89 = vector.load %arg2[%c14, %c0_27] : memref<32x896xf32, #tpu.memory_space<vmem>>, vector<1x32xf32>
    %c15 = arith.constant 15 : index
    %c0_28 = arith.constant 0 : index
    %90 = vector.load %arg2[%c15, %c0_28] : memref<32x896xf32, #tpu.memory_space<vmem>>, vector<1x32xf32>
    %cst_29 = arith.constant dense<0.000000e+00> : vector<16xf32>
    %91 = vector.multi_reduction <add>, %88, %cst_29 [1] : vector<16x32xf32> to vector<16xf32>
    %92 = vector.shape_cast %91 : vector<16xf32> to vector<16x1xf32>
    %cst_30 = arith.constant 3.200000e+01 : f32
    %93 = vector.broadcast %cst_30 : f32 to vector<16x1xf32>
    %94 = arith.divf %92, %93 : vector<16x1xf32>
    %95 = arith.mulf %88, %88 : vector<16x32xf32>
    %cst_31 = arith.constant dense<0.000000e+00> : vector<16xf32>
    %96 = vector.multi_reduction <add>, %95, %cst_31 [1] : vector<16x32xf32> to vector<16xf32>
    %97 = vector.shape_cast %96 : vector<16xf32> to vector<16x1xf32>
    %cst_32 = arith.constant 3.200000e+01 : f32
    %98 = vector.broadcast %cst_32 : f32 to vector<16x1xf32>
    %99 = arith.divf %97, %98 : vector<16x1xf32>
    %100 = arith.mulf %94, %94 : vector<16x1xf32>
    %101 = arith.subf %99, %100 : vector<16x1xf32>
    %cst_33 = arith.constant 0.000000e+00 : f32
    %102 = vector.broadcast %cst_33 : f32 to vector<16x1xf32>
    %103 = arith.maximumf %101, %102 : vector<16x1xf32>
    %104 = vector.broadcast %94 : vector<16x1xf32> to vector<16x32xf32>
    %105 = arith.subf %88, %104 : vector<16x32xf32>
    %cst_34 = arith.constant 9.99999974E-6 : f32
    %106 = vector.broadcast %cst_34 : f32 to vector<16x1xf32>
    %107 = arith.addf %103, %106 : vector<16x1xf32>
    %108 = math.rsqrt %107 : vector<16x1xf32>
    %109 = vector.broadcast %108 : vector<16x1xf32> to vector<16x32xf32>
    %110 = arith.mulf %105, %109 : vector<16x32xf32>
    %111 = vector.broadcast %89 : vector<1x32xf32> to vector<16x32xf32>
    %112 = arith.mulf %110, %111 : vector<16x32xf32>
    %113 = vector.broadcast %90 : vector<1x32xf32> to vector<16x32xf32>
    %114 = arith.addf %112, %113 : vector<16x32xf32>
    %c0_35 = arith.constant 0 : index
    %c256 = arith.constant 256 : index
    %115 = vector.load %arg2[%c0_35, %c256] : memref<32x896xf32, #tpu.memory_space<vmem>>, vector<32x32xf32>
    %cst_36 = arith.constant dense<0.000000e+00> : vector<16x32xf32>
    %116 = tpu.matmul %114, %115, %cst_36 {dimension_numbers = #tpu.dot_dimension_numbers<[1], [0], [0], [1], [0, 0, 1, 1], [], []>} : vector<16x32xf32>, vector<32x32xf32>, vector<16x32xf32> -> vector<16x32xf32>
    %c16 = arith.constant 16 : index
    %c0_37 = arith.constant 0 : index
    %117 = vector.load %arg2[%c16, %c0_37] : memref<32x896xf32, #tpu.memory_space<vmem>>, vector<1x32xf32>
    %118 = vector.broadcast %117 : vector<1x32xf32> to vector<16x32xf32>
    %119 = arith.addf %116, %118 : vector<16x32xf32>
    %cst_38 = arith.constant 0.000000e+00 : f32
    %120 = vector.broadcast %cst_38 : f32 to vector<16x32xf32>
    %121 = arith.maximumf %119, %120 : vector<16x32xf32>
    %c0_39 = arith.constant 0 : index
    %c384 = arith.constant 384 : index
    %122 = vector.load %arg2[%c0_39, %c384] : memref<32x896xf32, #tpu.memory_space<vmem>>, vector<32x32xf32>
    %cst_40 = arith.constant dense<0.000000e+00> : vector<16x32xf32>
    %123 = tpu.matmul %121, %122, %cst_40 {dimension_numbers = #tpu.dot_dimension_numbers<[1], [0], [0], [1], [0, 0, 1, 1], [], []>} : vector<16x32xf32>, vector<32x32xf32>, vector<16x32xf32> -> vector<16x32xf32>
    %c17 = arith.constant 17 : index
    %c0_41 = arith.constant 0 : index
    %124 = vector.load %arg2[%c17, %c0_41] : memref<32x896xf32, #tpu.memory_space<vmem>>, vector<1x32xf32>
    %125 = vector.broadcast %124 : vector<1x32xf32> to vector<16x32xf32>
    %126 = arith.addf %123, %125 : vector<16x32xf32>
    %127 = arith.addf %114, %126 : vector<16x32xf32>
    %c18 = arith.constant 18 : index
    %c0_42 = arith.constant 0 : index
    %128 = vector.load %arg2[%c18, %c0_42] : memref<32x896xf32, #tpu.memory_space<vmem>>, vector<1x32xf32>
    %c19 = arith.constant 19 : index
    %c0_43 = arith.constant 0 : index
    %129 = vector.load %arg2[%c19, %c0_43] : memref<32x896xf32, #tpu.memory_space<vmem>>, vector<1x32xf32>
    %cst_44 = arith.constant dense<0.000000e+00> : vector<16xf32>
    %130 = vector.multi_reduction <add>, %127, %cst_44 [1] : vector<16x32xf32> to vector<16xf32>
    %131 = vector.shape_cast %130 : vector<16xf32> to vector<16x1xf32>
    %cst_45 = arith.constant 3.200000e+01 : f32
    %132 = vector.broadcast %cst_45 : f32 to vector<16x1xf32>
    %133 = arith.divf %131, %132 : vector<16x1xf32>
    %134 = arith.mulf %127, %127 : vector<16x32xf32>
    %cst_46 = arith.constant dense<0.000000e+00> : vector<16xf32>
    %135 = vector.multi_reduction <add>, %134, %cst_46 [1] : vector<16x32xf32> to vector<16xf32>
    %136 = vector.shape_cast %135 : vector<16xf32> to vector<16x1xf32>
    %cst_47 = arith.constant 3.200000e+01 : f32
    %137 = vector.broadcast %cst_47 : f32 to vector<16x1xf32>
    %138 = arith.divf %136, %137 : vector<16x1xf32>
    %139 = arith.mulf %133, %133 : vector<16x1xf32>
    %140 = arith.subf %138, %139 : vector<16x1xf32>
    %cst_48 = arith.constant 0.000000e+00 : f32
    %141 = vector.broadcast %cst_48 : f32 to vector<16x1xf32>
    %142 = arith.maximumf %140, %141 : vector<16x1xf32>
    %143 = vector.broadcast %133 : vector<16x1xf32> to vector<16x32xf32>
    %144 = arith.subf %127, %143 : vector<16x32xf32>
    %cst_49 = arith.constant 9.99999974E-6 : f32
    %145 = vector.broadcast %cst_49 : f32 to vector<16x1xf32>
    %146 = arith.addf %142, %145 : vector<16x1xf32>
    %147 = math.rsqrt %146 : vector<16x1xf32>
    %148 = vector.broadcast %147 : vector<16x1xf32> to vector<16x32xf32>
    %149 = arith.mulf %144, %148 : vector<16x32xf32>
    %150 = vector.broadcast %128 : vector<1x32xf32> to vector<16x32xf32>
    %151 = arith.mulf %149, %150 : vector<16x32xf32>
    %152 = vector.broadcast %129 : vector<1x32xf32> to vector<16x32xf32>
    %153 = arith.addf %151, %152 : vector<16x32xf32>
    %154 = vector.shape_cast %153 : vector<16x32xf32> to vector<2x8x32xf32>
    %155 = vector.extract_strided_slice %154 {offsets = [0, 7, 0], sizes = [2, 1, 32], strides = [1, 1, 1]} : vector<2x8x32xf32> to vector<2x1x32xf32>
    %156 = vector.shape_cast %155 : vector<2x1x32xf32> to vector<2x32xf32>
    %c0_50 = arith.constant 0 : index
    %c512 = arith.constant 512 : index
    %157 = vector.load %arg2[%c0_50, %c512] : memref<32x896xf32, #tpu.memory_space<vmem>>, vector<32x128xf32>
    %cst_51 = arith.constant dense<0.000000e+00> : vector<2x128xf32>
    %158 = tpu.matmul %156, %157, %cst_51 {dimension_numbers = #tpu.dot_dimension_numbers<[1], [0], [0], [1], [0, 0, 1, 1], [], []>} : vector<2x32xf32>, vector<32x128xf32>, vector<2x128xf32> -> vector<2x128xf32>
    %c20 = arith.constant 20 : index
    %c0_52 = arith.constant 0 : index
    %159 = vector.load %arg2[%c20, %c0_52] : memref<32x896xf32, #tpu.memory_space<vmem>>, vector<1x128xf32>
    %160 = vector.broadcast %159 : vector<1x128xf32> to vector<2x128xf32>
    %161 = arith.addf %158, %160 : vector<2x128xf32>
    %162 = vector.shape_cast %161 : vector<2x128xf32> to vector<1x2x128xf32>
    %c0_53 = arith.constant 0 : index
    %c0_54 = arith.constant 0 : index
    %c0_55 = arith.constant 0 : index
    %163 = vector.load %arg3[%c0_53, %c0_54, %c0_55] : memref<1x2x128xf32, #tpu.memory_space<vmem>>, vector<1x2x128xf32>
    tpu.vector_store %arg3[%c0_53, %c0_54, %c0_55], %162 {strides = array<i32>} : memref<1x2x128xf32, #tpu.memory_space<vmem>>, vector<1x2x128xf32>,
    return
  }
  func.func @transform_0(%arg0: i32) -> (i32, i32, i32, i32) {
    %c0_i32 = arith.constant 0 : i32
    %c0_i32_0 = arith.constant 0 : i32
    %c0_i32_1 = arith.constant 0 : i32
    %c0_i32_2 = arith.constant 0 : i32
    return %arg0, %c0_i32, %c0_i32_0, %c0_i32_1 : i32, i32, i32, i32
  }
  func.func @transform_1(%arg0: i32) -> (i32, i32) {
    %c0_i32 = arith.constant 0 : i32
    %c0_i32_0 = arith.constant 0 : i32
    %c0_i32_1 = arith.constant 0 : i32
    return %c0_i32, %c0_i32_0 : i32, i32
  }
  func.func @transform_2(%arg0: i32) -> (i32, i32, i32) {
    %c0_i32 = arith.constant 0 : i32
    %c0_i32_0 = arith.constant 0 : i32
    %c0_i32_1 = arith.constant 0 : i32
    return %arg0, %c0_i32, %c0_i32_0 : i32, i32, i32
  }
}

</mosaic_0001>

<llo_original>
// kernel: robformer_forward_batched.1
$region0: #{robformer_forward_batched.1}
  #allocation0 [shape = 'u32[]', space=smem, size = 0x4, offset = 0x4, fixed_abs, tag = 'smem constant byte address 0x4 - core index']
  #allocation1 [shape = 'u32[144,128]{1,0:T(1,128)}', space=vmem, size = 0x12000, scoped, tag = 'internal scratch']
  %s0 = inlined_call_operand.vmem [shape: f32[4,2,8,4], index: 0, kind: input, shape index: {}]
  %s1 = inlined_call_operand.hbm [shape: f32[32,896], index: 1, kind: input, shape index: {}]
  %s2 = inlined_call_operand.hbm [shape: f32[4,2,128], index: 2, kind: output, shape index: {}]
  %s3 = sld [smem:[#allocation0]]
  $region45: #{robformer_forward_batched.1} parent=0
    _
  %s5 = ssub.s32 1, %s3
  %s6 = scalar_select 0, %s5, %s3
  $region1: #{robformer_forward_batched.1} parent=0
    #allocation2 [shape = 'u8[114688]{0}', space=vmem, size = 0x1c000, scoped, tag = 'input window, operand 1, single buffered']
    #allocation3 [shape = 's32[2]{0}', space=sflag, size = 0x8, scoped, tag = 'scoped memory for robformer_forward_batched.1']
    #allocation4 [shape = 's32[2]{0}', space=sflag, size = 0x8, scoped, tag = 'scoped memory for robformer_forward_batched.1']
    #allocation5 [shape = 'u8[2048]{0}', space=vmem, size = 0x800, scoped, tag = 'output window, operand 0']
    %7 = vsyncpa [#allocation3], 0
    %8 = vsyncpa [#allocation4], 0
    %s9 = scalar_lea.sflag [#allocation4], 1
    %10 = vsyncpa %s9, 0
    loop: start=0, step=1, limit=6
    $region2: #{robformer_forward_batched.1} parent=1 // loop_pre_header
      _
    $region3: #{robformer_forward_batched.1} parent=1 // loop_header
      %s12 = sphi 0, %s16
      %p13 = scmp.ge.s32.totalorder %s12, 6
      %s22 = sphi 0, %s24
      %s25 = sphi 0, %s22
      %s26 = sphi 0, %s25
      %s42 = sphi 0, %s26
      %s46 = sphi 0, %s46
      %s48 = sphi 0, %s46
      %s49 = sphi 0, %s48
      %s63 = sphi 0, %s49
      %s69 = sphi 0, %s71
      %s72 = sphi 0, %s69
      %s73 = sphi 0, %s72
      %s89 = sphi 0, %s73
    $region4: #{robformer_forward_batched.1} parent=1 // loop_header_branch
      %15 = sbr.rel (%p13) target = $region8
    $region5: #{robformer_forward_batched.1} parent=1 // loop_body
      %s17 = ssub.s32 %s12, 1
      %s18 = ssub.s32 %s12, 2
      %s19 = sadd.s32 %s12, 1
      %s20 = ssub.s32 %s12, %s19
      %p21 = scmp.eq.s32.totalorder %s20, 0
      %s23 = sadd.s32 %s22, 1
      %s24 = scalar_select %p21, %s22, %s23
      %p27 = pneg %p21
      %p28 = scmp.eq.s32.totalorder %s12, 3
      %p29 = por %p27, %p28
      %p30 = scmp.ne.s32.totalorder %s22, %s25
      %p31 = scmp.eq.s32.totalorder %s12, 0
      %p32 = por %p30, %p31
      %p33 = scmp.ne.s32.totalorder %s22, %s25
      %p34 = scmp.eq.s32.totalorder %s17, 3
      %p35 = por %p33, %p34
      %p36 = scmp.ne.s32.totalorder %s25, %s26
      %p37 = scmp.eq.s32.totalorder %s17, 0
      %p38 = por %p36, %p37
      %p39 = scmp.ne.s32.totalorder %s25, %s26
      %p40 = scmp.eq.s32.totalorder %s18, 3
      %p41 = por %p39, %p40
      %p43 = scmp.ne.s32.totalorder %s26, %s42
      %p44 = scmp.eq.s32.totalorder %s18, 0
      %p45 = por %p43, %p44
      %s47 = sadd.s32 %s46, 1
      %p50 = scmp.eq.s32.totalorder %s12, 3
      %p51 = scmp.ne.s32.totalorder %s46, %s48
      %p52 = scmp.eq.s32.totalorder %s12, 0
      %p53 = por %p51, %p52
      %p54 = scmp.ne.s32.totalorder %s46, %s48
      %p55 = scmp.eq.s32.totalorder %s17, 3
      %p56 = por %p54, %p55
      %p57 = scmp.ne.s32.totalorder %s48, %s49
      %p58 = scmp.eq.s32.totalorder %s17, 0
      %p59 = por %p57, %p58
      %p60 = scmp.ne.s32.totalorder %s48, %s49
      %p61 = scmp.eq.s32.totalorder %s18, 3
      %p62 = por %p60, %p61
      %p64 = scmp.ne.s32.totalorder %s49, %s63
      %p65 = scmp.eq.s32.totalorder %s18, 0
      %p66 = por %p64, %p65
      %s67 = ssub.s32 %s12, %s19
      %p68 = scmp.eq.s32.totalorder %s67, 0
      %s70 = sadd.s32 %s69, 1
      %s71 = scalar_select %p68, %s69, %s70
      %p74 = pneg %p68
      %p75 = scmp.eq.s32.totalorder %s12, 3
      %p76 = por %p74, %p75
      %p77 = scmp.ne.s32.totalorder %s69, %s72
      %p78 = scmp.eq.s32.totalorder %s12, 0
      %p79 = por %p77, %p78
      %p80 = scmp.ne.s32.totalorder %s69, %s72
      %p81 = scmp.eq.s32.totalorder %s17, 3
      %p82 = por %p80, %p81
      %p83 = scmp.ne.s32.totalorder %s72, %s73
      %p84 = scmp.eq.s32.totalorder %s17, 0
      %p85 = por %p83, %p84
      %p86 = scmp.ne.s32.totalorder %s72, %s73
      %p87 = scmp.eq.s32.totalorder %s18, 3
      %p88 = por %p86, %p87
      %p90 = scmp.ne.s32.totalorder %s73, %s89
      %p91 = scmp.eq.s32.totalorder %s18, 0
      %p92 = por %p90, %p91
      %p93 = scmp.le.s32.totalorder 1, %s12
      %p94 = scmp.lt.s32.totalorder %s12, 5
      %p95 = pnand %p93, %p94
      %p96 = pneg %p95
      // Predicated region
      $region9: #{robformer_forward_batched.1} parent=5 // pred_check
        _
      $region10: #{robformer_forward_batched.1} parent=5 // pred_check_branch
        %98 = sbr.rel (%p95) target = $region12
      $region11: #{robformer_forward_batched.1} parent=5 // pred_region
        %s99 = ssub.s32 %s12, 1
        // Predicated region
        $region13: #{robformer_forward_batched.1} parent=11 // pred_check
          %p100 = pneg %p59
        $region14: #{robformer_forward_batched.1} parent=11 // pred_check_branch
          %102 = sbr.rel (%p100) target = $region16
        $region15: #{robformer_forward_batched.1} parent=11 // pred_region
          %s104 = ssub.s32 3584, 3584
          %105 = vsyncadd [#allocation3], %s104
          %s106 = sshll.u32 [#allocation2], 4
          %s107 = int_to_ptr.vmem [resolvable:$true] %s106
          %112 = dma.hbm_to_vmem [thread:$0]  %s1, 3584, %s107, [#allocation3], 896, 896, 56
        $region16: #{robformer_forward_batched.1} parent=11 // pred_fallthru
          _
      $region12: #{robformer_forward_batched.1} parent=5 // pred_fallthru
        _
      %p113 = scmp.lt.s32.totalorder %s12, 4
      // Predicated region
      $region17: #{robformer_forward_batched.1} parent=5 // pred_check
        %p114 = pneg %p113
      $region18: #{robformer_forward_batched.1} parent=5 // pred_check_branch
        %116 = sbr.rel (%p114) target = $region20
      $region19: #{robformer_forward_batched.1} parent=5 // pred_region
        // Predicated region
        $region21: #{robformer_forward_batched.1} parent=19 // pred_check
          %p117 = pneg %p32
        $region22: #{robformer_forward_batched.1} parent=19 // pred_check_branch
          %119 = sbr.rel (%p117) target = $region24
        $region23: #{robformer_forward_batched.1} parent=19 // pred_region
          %p120 = scmp.lt.s32.totalorder %s12, 3
          %s121 = scalar_select %p120, %s12, 3
          %s122 = smul.addr %s121, 2
          %s123 = smul.addr %s122, 8
          %s124 = scalar_lea.vmem %s0, %s123
        $region24: #{robformer_forward_batched.1} parent=19 // pred_fallthru
          _
      $region20: #{robformer_forward_batched.1} parent=5 // pred_fallthru
        _
      %p125 = scmp.le.s32.totalorder 1, %s12
      %p126 = scmp.lt.s32.totalorder %s12, 5
      %p127 = pnand %p125, %p126
      %p128 = pneg %p127
      // Predicated region
      $region25: #{robformer_forward_batched.1} parent=5 // pred_check
        _
      $region26: #{robformer_forward_batched.1} parent=5 // pred_check_branch
        %130 = sbr.rel (%p127) target = $region28
      $region27: #{robformer_forward_batched.1} parent=5 // pred_region
        %s131 = ssub.s32 %s12, 1
        // Predicated region
        $region29: #{robformer_forward_batched.1} parent=27 // pred_check
          %p132 = pneg %p59
        $region30: #{robformer_forward_batched.1} parent=27 // pred_check_branch
          %134 = sbr.rel (%p132) target = $region32
        $region31: #{robformer_forward_batched.1} parent=27 // pred_region
          %135 = dma.done [#allocation3], 3584
        $region32: #{robformer_forward_batched.1} parent=27 // pred_fallthru
          _
        %p136 = scmp.lt.s32.totalorder %s17, 3
        %s137 = scalar_select %p136, %s17, 3
        %s138 = smul.addr %s137, 2
        %s139 = smul.addr %s138, 8
        %s140 = scalar_lea.vmem %s0, %s139
        %p141 = pneg %p38
        %p142 = pneg %p35
        %p143 = pneg %p59
        %p144 = pneg %p56
        %p145 = pneg %p85
        %p146 = pneg %p82
        %s147 = sand.u32 %s72, 1
        %s148 = scalar_lea.sflag [#allocation4], %s147
        %s149 = sand.u32 %s72, 1
        %s150 = smul.addr %s149, 2
        %s151 = scalar_lea.vmem [#allocation5], %s150
        %p152 = scmp.lt.s32.totalorder %s17, 3
        %s153 = scalar_select %p152, %s17, 3
        %s154 = smul.addr %s153, 2
        %s155 = smul.addr %s154, 8
        %s156 = scalar_lea.vmem %s0, %s155
        %v157 = vld [vmem:[%s156] sm:$0xff]
        %v158 = vld [vmem:[%s156 + $0x8] sm:$0xff]
        %v159 = vlaneseq
        %v160 = vshrl.u32 %v159, 7
        %v161 = vadd.s32 %v160, 8
        %vm162 = vcmp.lt.s32.totalorder %v160, 0
        %v163 = vsub.s32 0, %v160
        %v164 = vsel %vm162, %v163, %v160
        %v165 = vshrl.u32 %v164, 3
        %v166 = vand.u32 %v164, 7
        %v167 = vsub.s32 0, %v166
        %v168 = vsel %vm162, %v167, %v166
        %vm169 = vcmp.lt.s32.totalorder %v161, 0
        %v170 = vsub.s32 0, %v161
        %v171 = vsel %vm169, %v170, %v161
        %v172 = vshrl.u32 %v171, 3
        %v173 = vand.u32 %v171, 7
        %v174 = vsub.s32 0, %v173
        %v175 = vsel %vm169, %v174, %v173
        %vm176 = vcmp.ne.s32.totalorder %v168, 0
        %vm177 = vcmp.ne.s32.totalorder %v175, 0
        %vm178 = vcmp.lt.s32.totalorder %v168, 0
        %vm179 = vcmp.lt.s32.totalorder %v175, 0
        %vm180 = vmand %vm178, %vm176
        %vm181 = vmand %vm179, %vm177
        %v182 = vadd.s32 %v168, 8
        %v183 = vadd.s32 %v175, 8
        %v184 = vsel %vm180, %v182, %v168
        %v185 = vsel %vm181, %v183, %v175
        %vm186 = vcmp.eq.s32.totalorder %v184, 0
        %vm187 = vcmp.eq.s32.totalorder %v185, 0
        %v188 = vrot.slane %v157, 7
        %v189 = vrot.slane %v158, 7
        %vm190 = vcmp.lt.s32.totalorder %v160, 1
        %v191 = vsel %vm190, %v188, %v189
        %v192 = vsel %vm190, %v189, %v188
        %v193 = vsel %vm186, 0.0, %v192
        %v194 = vsel %vm187, 0.0, %v191
        %vm195 = vcmp.eq.s32.totalorder %v184, 7
        %vm196 = vcmp.eq.s32.totalorder %v185, 7
        %v197 = vrot.slane %v157, 1
        %v198 = vrot.slane %v158, 1
        %vm199 = vcmp.lt.s32.totalorder %v160, 7
        %v200 = vsel %vm199, %v197, %v198
        %v201 = vsel %vm199, %v198, %v197
        %v202 = vsel %vm195, 0.0, %v200
        %v203 = vsel %vm196, 0.0, %v201
        %v204 = vld [vmem:[#allocation2 + $0x38] ss:$0 sm:$0xff]
        %v205 = vmul.f32 %v193, %v204
        %v206 = vmul.f32 %v194, %v204
        %v207 = vld [vmem:[#allocation2 + $0x39] ss:$0 sm:$0xff]
        %v208 = vmul.f32 %v157, %v207
        %v209 = vmul.f32 %v158, %v207
        %v210 = vadd.f32 %v205, %v208
        %v211 = vadd.f32 %v206, %v209
        %v212 = vld [vmem:[#allocation2 + $0x3a] ss:$0 sm:$0xff]
        %v213 = vmul.f32 %v202, %v212
        %v214 = vmul.f32 %v203, %v212
        %v215 = vadd.f32 %v210, %v213
        %v216 = vadd.f32 %v211, %v214
        %v217 = vld [vmem:[#allocation2 + $0x3b] ss:$0 sm:$0xff]
        %v218 = vadd.f32 %v215, %v217
        %v219 = vadd.f32 %v216, %v217
        %v220 = vld [vmem:[#allocation2] sm:$0xf]
        %v221 = vld [vmem:[#allocation2 + $0x3c] ss:$0 sm:$0xff]
        %vm222 = vcmask 31744
        %v224 = vsel %vm222, %v218, 0
        %v227 = vsel %vm222, %v219, 0
        %vm229 = vcmask 1043456
        %v231 = vsel %vm229, %v220, 0
        %233 = vmatprep.subr.mxu0 0.0
        %234 = vmatpush1.msra.mxu0 %v231
        %235 = vmatprep.subr.mxu0 0.0
        %236 = vmatpush1.msra.mxu0 0.0
        %237 = vmatprep.subr.mxu0 0.0
        %238 = vmatpush1.msra.mxu0 0.0
        %239 = vmatprep.subr.mxu0 0.0
        %240 = vmatpush1.msra.mxu0 0.0
        %241 = vmatprep.subr.mxu0 0.0
        %242 = vmatpush1.msra.mxu0 0.0
        %243 = vmatprep.subr.mxu0 0.0
        %244 = vmatpush1.msra.mxu0 0.0
        %245 = vmatprep.subr.mxu0 0.0
        %246 = vmatpush1.msra.mxu0 0.0
        %247 = vmatprep.subr.mxu0 0.0
        %248 = vmatpush1.msra.mxu0 0.0
        %249 = vmatprep.subr.mxu0 0.0
        %250 = vmatpush1.msra.mxu0 0.0
        %251 = vmatprep.subr.mxu0 0.0
        %252 = vmatpush1.msra.mxu0 0.0
        %253 = vmatprep.subr.mxu0 0.0
        %254 = vmatpush1.msra.mxu0 0.0
        %255 = vmatprep.subr.mxu0 0.0
        %256 = vmatpush1.msra.mxu0 0.0
        %257 = vmatprep.subr.mxu0 0.0
        %258 = vmatpush1.msra.mxu0 0.0
        %259 = vmatprep.subr.mxu0 0.0
        %260 = vmatpush1.msra.mxu0 0.0
        %261 = vmatprep.subr.mxu0 0.0
        %262 = vmatpush1.msra.mxu0 0.0
        %263 = vmatprep.subr.mxu0 0.0
        %264 = vmatpush1.msra.mxu0 0.0
        %265 = vmatprep.subr.mxu0 0.0
        %266 = vmatpush1.msra.mxu0 0.0
        %267 = vmatprep.subr.mxu0 0.0
        %268 = vmatpush1.msra.mxu0 0.0
        %269 = vmatprep.subr.mxu0 0.0
        %270 = vmatpush1.msra.mxu0 0.0
        %271 = vmatprep.subr.mxu0 0.0
        %272 = vmatpush1.msra.mxu0 0.0
        %273 = vmatprep.subr.mxu0 0.0
        %274 = vmatpush1.msra.mxu0 0.0
        %275 = vmatprep.subr.mxu0 0.0
        %276 = vmatpush1.msra.mxu0 0.0
        %277 = vmatprep.subr.mxu0 0.0
        %278 = vmatpush1.msra.mxu0 0.0
        %279 = vmatprep.subr.mxu0 0.0
        %280 = vmatpush1.msra.mxu0 0.0
        %281 = vmatprep.subr.mxu0 0.0
        %282 = vmatpush1.msra.mxu0 0.0
        %283 = vmatprep.subr.mxu0 0.0
        %284 = vmatpush1.msra.mxu0 0.0
        %285 = vmatprep.subr.mxu0 0.0
        %286 = vmatpush1.msra.mxu0 0.0
        %287 = vmatprep.subr.mxu0 0.0
        %288 = vmatpush1.msra.mxu0 0.0
        %289 = vmatprep.subr.mxu0 0.0
        %290 = vmatpush1.msra.mxu0 0.0
        %291 = vmatprep.subr.mxu0 0.0
        %292 = vmatpush1.msra.mxu0 0.0
        %293 = vmatprep.subr.mxu0 0.0
        %294 = vmatpush1.msra.mxu0 0.0
        %295 = vmatprep.subr.mxu0 0.0
        %296 = vmatpush1.msra.mxu0 0.0
        %297 = vmatprep.mubr.f32.mxu0 0.0
        %298 = vmatmul.mubr.f32.gmra.mrb[0].mxu0 %v224
        %v299 = vpop.f32.mrb[0].mxu0
        %v300 = vadd.f32 %v221, %v299
        %v301 = vpop.f32.mrb[0].mxu0
        %302 = vmatprep.mubr.f32.mxu0 0.0
        %303 = vmatmul.mubr.f32.gmra.mrb[0].mxu0 %v227
        %v304 = vpop.f32.mrb[0].mxu0
        %v305 = vadd.f32 %v221, %v304
        %v306 = vpop.f32.mrb[0].mxu0
        %307 = vdwg.mxu0
        %v308 = vld [vmem:[#allocation2 + $0x28] sm:$0xff]
        %v309 = vld [vmem:[#allocation2 + $0x60] sm:$0xff]
        %v310 = vld [vmem:[#allocation2 + $0x98] sm:$0xff]
        %v311 = vld [vmem:[#allocation2 + $0xd0] sm:$0xff]
        %v312 = vld [vmem:[#allocation2 + $0x30] sm:$0xff]
        %315 = vrot.lane.b32.xlu0 %v300, 96
        %v316 = vpop.permute.xlu0 %315
        %317 = vrot.lane.b32.xlu0 %v305, 96
        %v318 = vpop.permute.xlu0 %317
        %v321 = vmul.f32 %v300, %v316
        %v322 = vmul.f32 %v300, %v318
        %v323 = vmul.f32 %v305, %v316
        %v324 = vmul.f32 %v305, %v318
        %329 = vrot.lane.b32.xlu0 %v321, 96
        %v330 = vpop.permute.xlu0 %329
        %331 = vrot.lane.b32.xlu0 %v322, 96
        %v332 = vpop.permute.xlu0 %331
        %333 = vrot.lane.b32.xlu0 %v323, 96
        %v334 = vpop.permute.xlu0 %333
        %335 = vrot.lane.b32.xlu0 %v324, 96
        %v336 = vpop.permute.xlu0 %335
        %vm337 = vcmask 261120
        %v338 = vsel %vm337, %v330, 0
        %v340 = vsel %vm337, %v332, 0
        %v342 = vsel %vm337, %v334, 0
        %v344 = vsel %vm337, %v336, 0
        %346 = vmatprep.subr.mxu0 0.0
        %347 = vmatpush1.msra.mxu0 %v308
        %348 = vmatprep.subr.mxu0 0.0
        %349 = vmatpush1.msra.mxu0 %v309
        %350 = vmatprep.subr.mxu0 0.0
        %351 = vmatpush1.msra.mxu0 %v310
        %352 = vmatprep.subr.mxu0 0.0
        %353 = vmatpush1.msra.mxu0 %v311
        %354 = vmatprep.subr.mxu0 0.0
        %355 = vmatpush1.msra.mxu0 0.0
        %356 = vmatprep.subr.mxu0 0.0
        %357 = vmatpush1.msra.mxu0 0.0
        %358 = vmatprep.subr.mxu0 0.0
        %359 = vmatpush1.msra.mxu0 0.0
        %360 = vmatprep.subr.mxu0 0.0
        %361 = vmatpush1.msra.mxu0 0.0
        %362 = vmatprep.subr.mxu0 0.0
        %363 = vmatpush1.msra.mxu0 0.0
        %364 = vmatprep.subr.mxu0 0.0
        %365 = vmatpush1.msra.mxu0 0.0
        %366 = vmatprep.subr.mxu0 0.0
        %367 = vmatpush1.msra.mxu0 0.0
        %368 = vmatprep.subr.mxu0 0.0
        %369 = vmatpush1.msra.mxu0 0.0
        %370 = vmatprep.subr.mxu0 0.0
        %371 = vmatpush1.msra.mxu0 0.0
        %372 = vmatprep.subr.mxu0 0.0
        %373 = vmatpush1.msra.mxu0 0.0
        %374 = vmatprep.subr.mxu0 0.0
        %375 = vmatpush1.msra.mxu0 0.0
        %376 = vmatprep.subr.mxu0 0.0
        %377 = vmatpush1.msra.mxu0 0.0
        %378 = vmatprep.subr.mxu0 0.0
        %379 = vmatpush1.msra.mxu0 0.0
        %380 = vmatprep.subr.mxu0 0.0
        %381 = vmatpush1.msra.mxu0 0.0
        %382 = vmatprep.subr.mxu0 0.0
        %383 = vmatpush1.msra.mxu0 0.0
        %384 = vmatprep.subr.mxu0 0.0
        %385 = vmatpush1.msra.mxu0 0.0
        %386 = vmatprep.subr.mxu0 0.0
        %387 = vmatpush1.msra.mxu0 0.0
        %388 = vmatprep.subr.mxu0 0.0
        %389 = vmatpush1.msra.mxu0 0.0
        %390 = vmatprep.subr.mxu0 0.0
        %391 = vmatpush1.msra.mxu0 0.0
        %392 = vmatprep.subr.mxu0 0.0
        %393 = vmatpush1.msra.mxu0 0.0
        %394 = vmatprep.subr.mxu0 0.0
        %395 = vmatpush1.msra.mxu0 0.0
        %396 = vmatprep.subr.mxu0 0.0
        %397 = vmatpush1.msra.mxu0 0.0
        %398 = vmatprep.subr.mxu0 0.0
        %399 = vmatpush1.msra.mxu0 0.0
        %400 = vmatprep.subr.mxu0 0.0
        %401 = vmatpush1.msra.mxu0 0.0
        %402 = vmatprep.subr.mxu0 0.0
        %403 = vmatpush1.msra.mxu0 0.0
        %404 = vmatprep.subr.mxu0 0.0
        %405 = vmatpush1.msra.mxu0 0.0
        %406 = vmatprep.subr.mxu0 0.0
        %407 = vmatpush1.msra.mxu0 0.0
        %408 = vmatprep.subr.mxu0 0.0
        %409 = vmatpush1.msra.mxu0 0.0
        %410 = vmatprep.mubr.f32.mxu0 0.0
        %411 = vmatmul.mubr.f32.gmra.mrb[0].mxu0 %v338
        %v412 = vpop.f32.mrb[0].mxu0
        %v413 = vadd.f32 0.0, %v412
        %v414 = vpop.f32.mrb[0].mxu0
        %415 = vmatprep.mubr.f32.mxu0 0.0
        %416 = vmatmul.mubr.f32.gmra.mrb[0].mxu0 %v340
        %v417 = vpop.f32.mrb[0].mxu0
        %v418 = vadd.f32 0.0, %v417
        %v419 = vpop.f32.mrb[0].mxu0
        %420 = vmatprep.mubr.f32.mxu0 0.0
        %421 = vmatmul.mubr.f32.gmra.mrb[0].mxu0 %v342
        %v422 = vpop.f32.mrb[0].mxu0
        %v423 = vadd.f32 0.0, %v422
        %v424 = vpop.f32.mrb[0].mxu0
        %425 = vmatprep.mubr.f32.mxu0 0.0
        %426 = vmatmul.mubr.f32.gmra.mrb[0].mxu0 %v344
        %v427 = vpop.f32.mrb[0].mxu0
        %v428 = vadd.f32 0.0, %v427
        %v429 = vpop.f32.mrb[0].mxu0
        %430 = vdwg.mxu0
        %vm431 = vcmask 64512
        %v432 = vsel %vm431, %v413, -inf
        %v433 = vsel %vm431, %v418, -inf
        %v434 = vmax.f32 %v432, %v433
        %v435 = vsel %vm431, %v423, -inf
        %v436 = vsel %vm431, %v428, -inf
        %v437 = vmax.f32 %v435, %v436
        %v438 = vsub.f32 %v413, %v434
        %v439 = vsub.f32 %v418, %v434
        %v440 = vsub.f32 %v423, %v437
        %v441 = vsub.f32 %v428, %v437
        %v442 = vmul.f32 %v438, 1.442695
        %v443 = vpow.pop %v442
        %v444 = vmul.f32 %v439, 1.442695
        %v445 = vpow.pop %v444
        %v446 = vmul.f32 %v440, 1.442695
        %v447 = vpow.pop %v446
        %v448 = vmul.f32 %v441, 1.442695
        %v449 = vpow.pop %v448
        %v450 = vsel %vm431, %v443, 0.0
        %v451 = vsel %vm431, %v445, 0.0
        %v452 = vadd.f32 %v450, %v451
        %v453 = vsel %vm431, %v447, 0.0
        %v454 = vsel %vm431, %v449, 0.0
        %v455 = vadd.f32 %v453, %v454
        %v456 = vrcp.pop %v452
        %v457 = vrcp.pop %v455
        %v458 = vmul.f32 %v443, %v456
        %v459 = vmul.f32 %v445, %v456
        %v460 = vmul.f32 %v447, %v457
        %v461 = vmul.f32 %v449, %v457
        %v463 = vsel %vm431, %v458, 0
        %v466 = vsel %vm431, %v459, 0
        %v469 = vsel %vm431, %v460, 0
        %v472 = vsel %vm431, %v461, 0
        %474 = vmatprep.subr.mxu0 0.0
        %475 = vmatpush1.msra.mxu0 %v312
        %476 = vmatprep.subr.mxu0 0.0
        %477 = vmatpush1.msra.mxu0 0.0
        %478 = vmatprep.subr.mxu0 0.0
        %479 = vmatpush1.msra.mxu0 0.0
        %480 = vmatprep.subr.mxu0 0.0
        %481 = vmatpush1.msra.mxu0 0.0
        %482 = vmatprep.subr.mxu0 0.0
        %483 = vmatpush1.msra.mxu0 0.0
        %484 = vmatprep.subr.mxu0 0.0
        %485 = vmatpush1.msra.mxu0 0.0
        %486 = vmatprep.subr.mxu0 0.0
        %487 = vmatpush1.msra.mxu0 0.0
        %488 = vmatprep.subr.mxu0 0.0
        %489 = vmatpush1.msra.mxu0 0.0
        %490 = vmatprep.subr.mxu0 0.0
        %491 = vmatpush1.msra.mxu0 0.0
        %492 = vmatprep.subr.mxu0 0.0
        %493 = vmatpush1.msra.mxu0 0.0
        %494 = vmatprep.subr.mxu0 0.0
        %495 = vmatpush1.msra.mxu0 0.0
        %496 = vmatprep.subr.mxu0 0.0
        %497 = vmatpush1.msra.mxu0 0.0
        %498 = vmatprep.subr.mxu0 0.0
        %499 = vmatpush1.msra.mxu0 0.0
        %500 = vmatprep.subr.mxu0 0.0
        %501 = vmatpush1.msra.mxu0 0.0
        %502 = vmatprep.subr.mxu0 0.0
        %503 = vmatpush1.msra.mxu0 0.0
        %504 = vmatprep.subr.mxu0 0.0
        %505 = vmatpush1.msra.mxu0 0.0
        %506 = vmatprep.subr.mxu0 0.0
        %507 = vmatpush1.msra.mxu0 0.0
        %508 = vmatprep.subr.mxu0 0.0
        %509 = vmatpush1.msra.mxu0 0.0
        %510 = vmatprep.subr.mxu0 0.0
        %511 = vmatpush1.msra.mxu0 0.0
        %512 = vmatprep.subr.mxu0 0.0
        %513 = vmatpush1.msra.mxu0 0.0
        %514 = vmatprep.subr.mxu0 0.0
        %515 = vmatpush1.msra.mxu0 0.0
        %516 = vmatprep.subr.mxu0 0.0
        %517 = vmatpush1.msra.mxu0 0.0
        %518 = vmatprep.subr.mxu0 0.0
        %519 = vmatpush1.msra.mxu0 0.0
        %520 = vmatprep.subr.mxu0 0.0
        %521 = vmatpush1.msra.mxu0 0.0
        %522 = vmatprep.subr.mxu0 0.0
        %523 = vmatpush1.msra.mxu0 0.0
        %524 = vmatprep.subr.mxu0 0.0
        %525 = vmatpush1.msra.mxu0 0.0
        %526 = vmatprep.subr.mxu0 0.0
        %527 = vmatpush1.msra.mxu0 0.0
        %528 = vmatprep.subr.mxu0 0.0
        %529 = vmatpush1.msra.mxu0 0.0
        %530 = vmatprep.subr.mxu0 0.0
        %531 = vmatpush1.msra.mxu0 0.0
        %532 = vmatprep.subr.mxu0 0.0
        %533 = vmatpush1.msra.mxu0 0.0
        %534 = vmatprep.subr.mxu0 0.0
        %535 = vmatpush1.msra.mxu0 0.0
        %536 = vmatprep.subr.mxu0 0.0
        %537 = vmatpush1.msra.mxu0 0.0
        %538 = vmatprep.mubr.f32.mxu0 0.0
        %539 = vmatmul.mubr.f32.gmra.mrb[0].mxu0 %v463
        %v540 = vpop.f32.mrb[0].mxu0
        %v541 = vadd.f32 0.0, %v540
        %v542 = vpop.f32.mrb[0].mxu0
        %543 = vmatprep.mubr.f32.mxu0 0.0
        %544 = vmatmul.mubr.f32.gmra.mrb[0].mxu0 %v466
        %v545 = vpop.f32.mrb[0].mxu0
        %v546 = vadd.f32 0.0, %v545
        %v547 = vpop.f32.mrb[0].mxu0
        %548 = vmatprep.mubr.f32.mxu0 0.0
        %549 = vmatmul.mubr.f32.gmra.mrb[0].mxu0 %v469
        %v550 = vpop.f32.mrb[0].mxu0
        %v551 = vadd.f32 0.0, %v550
        %v552 = vpop.f32.mrb[0].mxu0
        %553 = vmatprep.mubr.f32.mxu0 0.0
        %554 = vmatmul.mubr.f32.gmra.mrb[0].mxu0 %v472
        %v555 = vpop.f32.mrb[0].mxu0
        %v556 = vadd.f32 0.0, %v555
        %v557 = vpop.f32.mrb[0].mxu0
        %558 = vdwg.mxu0
        %559 = vrot.lane.b32.xlu0 %v300, 32
        %v560 = vpop.permute.xlu0 %559
        %561 = vrot.lane.b32.xlu0 %v305, 32
        %v562 = vpop.permute.xlu0 %561
        %v565 = vmul.f32 %v541, %v560
        %v566 = vmul.f32 %v546, %v562
        %v567 = vmul.f32 %v551, %v560
        %v568 = vmul.f32 %v556, %v562
        %v569 = vsel %vm337, %v565, 0.0
        %v570 = vsel %vm337, %v566, 0.0
        %v571 = vadd.f32 %v569, %v570
        %v572 = vsel %vm337, %v567, 0.0
        %v573 = vsel %vm337, %v568, 0.0
        %v574 = vadd.f32 %v572, %v573
        %v575 = vld [vmem:[#allocation2 + $0x8] sm:$0xff]
        %v576 = vld [vmem:[#allocation2 + $0x40] sm:$0xff]
        %v577 = vld [vmem:[#allocation2 + $0x78] sm:$0xff]
        %v578 = vld [vmem:[#allocation2 + $0xb0] sm:$0xff]
        %v579 = vld [vmem:[#allocation2 + $0x3d] ss:$0 sm:$0xff]
        %v581 = vsel %vm337, %v571, 0
        %v584 = vsel %vm337, %v574, 0
        %586 = vmatprep.subr.mxu0 0.0
        %587 = vmatpush1.msra.mxu0 %v575
        %588 = vmatprep.subr.mxu0 0.0
        %589 = vmatpush1.msra.mxu0 %v576
        %590 = vmatprep.subr.mxu0 0.0
        %591 = vmatpush1.msra.mxu0 %v577
        %592 = vmatprep.subr.mxu0 0.0
        %593 = vmatpush1.msra.mxu0 %v578
        %594 = vmatprep.subr.mxu0 0.0
        %595 = vmatpush1.msra.mxu0 0.0
        %596 = vmatprep.subr.mxu0 0.0
        %597 = vmatpush1.msra.mxu0 0.0
        %598 = vmatprep.subr.mxu0 0.0
        %599 = vmatpush1.msra.mxu0 0.0
        %600 = vmatprep.subr.mxu0 0.0
        %601 = vmatpush1.msra.mxu0 0.0
        %602 = vmatprep.subr.mxu0 0.0
        %603 = vmatpush1.msra.mxu0 0.0
        %604 = vmatprep.subr.mxu0 0.0
        %605 = vmatpush1.msra.mxu0 0.0
        %606 = vmatprep.subr.mxu0 0.0
        %607 = vmatpush1.msra.mxu0 0.0
        %608 = vmatprep.subr.mxu0 0.0
        %609 = vmatpush1.msra.mxu0 0.0
        %610 = vmatprep.subr.mxu0 0.0
        %611 = vmatpush1.msra.mxu0 0.0
        %612 = vmatprep.subr.mxu0 0.0
        %613 = vmatpush1.msra.mxu0 0.0
        %614 = vmatprep.subr.mxu0 0.0
        %615 = vmatpush1.msra.mxu0 0.0
        %616 = vmatprep.subr.mxu0 0.0
        %617 = vmatpush1.msra.mxu0 0.0
        %618 = vmatprep.subr.mxu0 0.0
        %619 = vmatpush1.msra.mxu0 0.0
        %620 = vmatprep.subr.mxu0 0.0
        %621 = vmatpush1.msra.mxu0 0.0
        %622 = vmatprep.subr.mxu0 0.0
        %623 = vmatpush1.msra.mxu0 0.0
        %624 = vmatprep.subr.mxu0 0.0
        %625 = vmatpush1.msra.mxu0 0.0
        %626 = vmatprep.subr.mxu0 0.0
        %627 = vmatpush1.msra.mxu0 0.0
        %628 = vmatprep.subr.mxu0 0.0
        %629 = vmatpush1.msra.mxu0 0.0
        %630 = vmatprep.subr.mxu0 0.0
        %631 = vmatpush1.msra.mxu0 0.0
        %632 = vmatprep.subr.mxu0 0.0
        %633 = vmatpush1.msra.mxu0 0.0
        %634 = vmatprep.subr.mxu0 0.0
        %635 = vmatpush1.msra.mxu0 0.0
        %636 = vmatprep.subr.mxu0 0.0
        %637 = vmatpush1.msra.mxu0 0.0
        %638 = vmatprep.subr.mxu0 0.0
        %639 = vmatpush1.msra.mxu0 0.0
        %640 = vmatprep.subr.mxu0 0.0
        %641 = vmatpush1.msra.mxu0 0.0
        %642 = vmatprep.subr.mxu0 0.0
        %643 = vmatpush1.msra.mxu0 0.0
        %644 = vmatprep.subr.mxu0 0.0
        %645 = vmatpush1.msra.mxu0 0.0
        %646 = vmatprep.subr.mxu0 0.0
        %647 = vmatpush1.msra.mxu0 0.0
        %648 = vmatprep.subr.mxu0 0.0
        %649 = vmatpush1.msra.mxu0 0.0
        %650 = vmatprep.mubr.f32.mxu0 0.0
        %651 = vmatmul.mubr.f32.gmra.mrb[0].mxu0 %v581
        %v652 = vpop.f32.mrb[0].mxu0
        %v653 = vadd.f32 %v579, %v652
        %v654 = vpop.f32.mrb[0].mxu0
        %655 = vmatprep.mubr.f32.mxu0 0.0
        %656 = vmatmul.mubr.f32.gmra.mrb[0].mxu0 %v584
        %v657 = vpop.f32.mrb[0].mxu0
        %v658 = vadd.f32 %v579, %v657
        %v659 = vpop.f32.mrb[0].mxu0
        %660 = vdwg.mxu0
        %v661 = vadd.f32 %v300, %v653
        %v662 = vadd.f32 %v305, %v658
        %v663 = vld [vmem:[#allocation2 + $0x3e] ss:$0 sm:$0xff]
        %v664 = vld [vmem:[#allocation2 + $0x3f] ss:$0 sm:$0xff]
        %v665 = vsel %vm337, %v661, 0.0
        %666 = vadd.xlane.f32.xlu0 %v665
        %v667 = vpop.xlane.xlu0 %666
        %v668 = vsel %vm337, %v662, 0.0
        %669 = vadd.xlane.f32.xlu0 %v668
        %v670 = vpop.xlane.xlu0 %669
        %v671 = vrcp.pop 32.0
        %v672 = vmul.f32 %v667, %v671
        %v673 = vmul.f32 %v670, %v671
        %v674 = vmul.f32 %v661, %v661
        %v675 = vmul.f32 %v662, %v662
        %v676 = vsel %vm337, %v674, 0.0
        %677 = vadd.xlane.f32.xlu0 %v676
        %v678 = vpop.xlane.xlu0 %677
        %v679 = vsel %vm337, %v675, 0.0
        %680 = vadd.xlane.f32.xlu0 %v679
        %v681 = vpop.xlane.xlu0 %680
        %v682 = vmul.f32 %v678, %v671
        %v683 = vmul.f32 %v681, %v671
        %v684 = vmul.f32 %v672, %v672
        %v685 = vmul.f32 %v673, %v673
        %v686 = vsub.f32 %v682, %v684
        %v687 = vsub.f32 %v683, %v685
        %v688 = vmax.f32 %v686, 0.0
        %v689 = vmax.f32 %v687, 0.0
        %v690 = vsub.f32 %v661, %v672
        %v691 = vsub.f32 %v662, %v673
        %v692 = vadd.f32 %v688, 1e-05
        %v693 = vadd.f32 %v689, 1e-05
        %v694 = vrsqrt.pop %v692
        %v695 = vrsqrt.pop %v693
        %v696 = vmul.f32 %v690, %v694
        %v697 = vmul.f32 %v691, %v695
        %v698 = vmul.f32 %v696, %v663
        %v699 = vmul.f32 %v697, %v663
        %v700 = vadd.f32 %v698, %v664
        %v701 = vadd.f32 %v699, %v664
        %v702 = vld [vmem:[#allocation2 + $0x10] sm:$0xff]
        %v703 = vld [vmem:[#allocation2 + $0x48] sm:$0xff]
        %v704 = vld [vmem:[#allocation2 + $0x80] sm:$0xff]
        %v705 = vld [vmem:[#allocation2 + $0xb8] sm:$0xff]
        %v706 = vld [vmem:[#allocation2 + $0x70] ss:$0 sm:$0xff]
        %v708 = vsel %vm337, %v700, 0
        %v711 = vsel %vm337, %v701, 0
        %713 = vmatprep.subr.mxu0 0.0
        %714 = vmatpush1.msra.mxu0 %v702
        %715 = vmatprep.subr.mxu0 0.0
        %716 = vmatpush1.msra.mxu0 %v703
        %717 = vmatprep.subr.mxu0 0.0
        %718 = vmatpush1.msra.mxu0 %v704
        %719 = vmatprep.subr.mxu0 0.0
        %720 = vmatpush1.msra.mxu0 %v705
        %721 = vmatprep.subr.mxu0 0.0
        %722 = vmatpush1.msra.mxu0 0.0
        %723 = vmatprep.subr.mxu0 0.0
        %724 = vmatpush1.msra.mxu0 0.0
        %725 = vmatprep.subr.mxu0 0.0
        %726 = vmatpush1.msra.mxu0 0.0
        %727 = vmatprep.subr.mxu0 0.0
        %728 = vmatpush1.msra.mxu0 0.0
        %729 = vmatprep.subr.mxu0 0.0
        %730 = vmatpush1.msra.mxu0 0.0
        %731 = vmatprep.subr.mxu0 0.0
        %732 = vmatpush1.msra.mxu0 0.0
        %733 = vmatprep.subr.mxu0 0.0
        %734 = vmatpush1.msra.mxu0 0.0
        %735 = vmatprep.subr.mxu0 0.0
        %736 = vmatpush1.msra.mxu0 0.0
        %737 = vmatprep.subr.mxu0 0.0
        %738 = vmatpush1.msra.mxu0 0.0
        %739 = vmatprep.subr.mxu0 0.0
        %740 = vmatpush1.msra.mxu0 0.0
        %741 = vmatprep.subr.mxu0 0.0
        %742 = vmatpush1.msra.mxu0 0.0
        %743 = vmatprep.subr.mxu0 0.0
        %744 = vmatpush1.msra.mxu0 0.0
        %745 = vmatprep.subr.mxu0 0.0
        %746 = vmatpush1.msra.mxu0 0.0
        %747 = vmatprep.subr.mxu0 0.0
        %748 = vmatpush1.msra.mxu0 0.0
        %749 = vmatprep.subr.mxu0 0.0
        %750 = vmatpush1.msra.mxu0 0.0
        %751 = vmatprep.subr.mxu0 0.0
        %752 = vmatpush1.msra.mxu0 0.0
        %753 = vmatprep.subr.mxu0 0.0
        %754 = vmatpush1.msra.mxu0 0.0
        %755 = vmatprep.subr.mxu0 0.0
        %756 = vmatpush1.msra.mxu0 0.0
        %757 = vmatprep.subr.mxu0 0.0
        %758 = vmatpush1.msra.mxu0 0.0
        %759 = vmatprep.subr.mxu0 0.0
        %760 = vmatpush1.msra.mxu0 0.0
        %761 = vmatprep.subr.mxu0 0.0
        %762 = vmatpush1.msra.mxu0 0.0
        %763 = vmatprep.subr.mxu0 0.0
        %764 = vmatpush1.msra.mxu0 0.0
        %765 = vmatprep.subr.mxu0 0.0
        %766 = vmatpush1.msra.mxu0 0.0
        %767 = vmatprep.subr.mxu0 0.0
        %768 = vmatpush1.msra.mxu0 0.0
        %769 = vmatprep.subr.mxu0 0.0
        %770 = vmatpush1.msra.mxu0 0.0
        %771 = vmatprep.subr.mxu0 0.0
        %772 = vmatpush1.msra.mxu0 0.0
        %773 = vmatprep.subr.mxu0 0.0
        %774 = vmatpush1.msra.mxu0 0.0
        %775 = vmatprep.subr.mxu0 0.0
        %776 = vmatpush1.msra.mxu0 0.0
        %777 = vmatprep.mubr.f32.mxu0 0.0
        %778 = vmatmul.mubr.f32.gmra.mrb[0].mxu0 %v708
        %v779 = vpop.f32.mrb[0].mxu0
        %v780 = vadd.f32 %v706, %v779
        %v781 = vpop.f32.mrb[0].mxu0
        %782 = vmatprep.mubr.f32.mxu0 0.0
        %783 = vmatmul.mubr.f32.gmra.mrb[0].mxu0 %v711
        %v784 = vpop.f32.mrb[0].mxu0
        %v785 = vadd.f32 %v706, %v784
        %v786 = vpop.f32.mrb[0].mxu0
        %787 = vdwg.mxu0
        %v788 = vmax.f32 %v780, 0.0
        %v789 = vmax.f32 %v785, 0.0
        %v790 = vld [vmem:[#allocation2 + $0x18] sm:$0xff]
        %v791 = vld [vmem:[#allocation2 + $0x50] sm:$0xff]
        %v792 = vld [vmem:[#allocation2 + $0x88] sm:$0xff]
        %v793 = vld [vmem:[#allocation2 + $0xc0] sm:$0xff]
        %v794 = vld [vmem:[#allocation2 + $0x71] ss:$0 sm:$0xff]
        %v796 = vsel %vm337, %v788, 0
        %v799 = vsel %vm337, %v789, 0
        %801 = vmatprep.subr.mxu0 0.0
        %802 = vmatpush1.msra.mxu0 %v790
        %803 = vmatprep.subr.mxu0 0.0
        %804 = vmatpush1.msra.mxu0 %v791
        %805 = vmatprep.subr.mxu0 0.0
        %806 = vmatpush1.msra.mxu0 %v792
        %807 = vmatprep.subr.mxu0 0.0
        %808 = vmatpush1.msra.mxu0 %v793
        %809 = vmatprep.subr.mxu0 0.0
        %810 = vmatpush1.msra.mxu0 0.0
        %811 = vmatprep.subr.mxu0 0.0
        %812 = vmatpush1.msra.mxu0 0.0
        %813 = vmatprep.subr.mxu0 0.0
        %814 = vmatpush1.msra.mxu0 0.0
        %815 = vmatprep.subr.mxu0 0.0
        %816 = vmatpush1.msra.mxu0 0.0
        %817 = vmatprep.subr.mxu0 0.0
        %818 = vmatpush1.msra.mxu0 0.0
        %819 = vmatprep.subr.mxu0 0.0
        %820 = vmatpush1.msra.mxu0 0.0
        %821 = vmatprep.subr.mxu0 0.0
        %822 = vmatpush1.msra.mxu0 0.0
        %823 = vmatprep.subr.mxu0 0.0
        %824 = vmatpush1.msra.mxu0 0.0
        %825 = vmatprep.subr.mxu0 0.0
        %826 = vmatpush1.msra.mxu0 0.0
        %827 = vmatprep.subr.mxu0 0.0
        %828 = vmatpush1.msra.mxu0 0.0
        %829 = vmatprep.subr.mxu0 0.0
        %830 = vmatpush1.msra.mxu0 0.0
        %831 = vmatprep.subr.mxu0 0.0
        %832 = vmatpush1.msra.mxu0 0.0
        %833 = vmatprep.subr.mxu0 0.0
        %834 = vmatpush1.msra.mxu0 0.0
        %835 = vmatprep.subr.mxu0 0.0
        %836 = vmatpush1.msra.mxu0 0.0
        %837 = vmatprep.subr.mxu0 0.0
        %838 = vmatpush1.msra.mxu0 0.0
        %839 = vmatprep.subr.mxu0 0.0
        %840 = vmatpush1.msra.mxu0 0.0
        %841 = vmatprep.subr.mxu0 0.0
        %842 = vmatpush1.msra.mxu0 0.0
        %843 = vmatprep.subr.mxu0 0.0
        %844 = vmatpush1.msra.mxu0 0.0
        %845 = vmatprep.subr.mxu0 0.0
        %846 = vmatpush1.msra.mxu0 0.0
        %847 = vmatprep.subr.mxu0 0.0
        %848 = vmatpush1.msra.mxu0 0.0
        %849 = vmatprep.subr.mxu0 0.0
        %850 = vmatpush1.msra.mxu0 0.0
        %851 = vmatprep.subr.mxu0 0.0
        %852 = vmatpush1.msra.mxu0 0.0
        %853 = vmatprep.subr.mxu0 0.0
        %854 = vmatpush1.msra.mxu0 0.0
        %855 = vmatprep.subr.mxu0 0.0
        %856 = vmatpush1.msra.mxu0 0.0
        %857 = vmatprep.subr.mxu0 0.0
        %858 = vmatpush1.msra.mxu0 0.0
        %859 = vmatprep.subr.mxu0 0.0
        %860 = vmatpush1.msra.mxu0 0.0
        %861 = vmatprep.subr.mxu0 0.0
        %862 = vmatpush1.msra.mxu0 0.0
        %863 = vmatprep.subr.mxu0 0.0
        %864 = vmatpush1.msra.mxu0 0.0
        %865 = vmatprep.mubr.f32.mxu0 0.0
        %866 = vmatmul.mubr.f32.gmra.mrb[0].mxu0 %v796
        %v867 = vpop.f32.mrb[0].mxu0
        %v868 = vadd.f32 %v794, %v867
        %v869 = vpop.f32.mrb[0].mxu0
        %870 = vmatprep.mubr.f32.mxu0 0.0
        %871 = vmatmul.mubr.f32.gmra.mrb[0].mxu0 %v799
        %v872 = vpop.f32.mrb[0].mxu0
        %v873 = vadd.f32 %v794, %v872
        %v874 = vpop.f32.mrb[0].mxu0
        %875 = vdwg.mxu0
        %v876 = vadd.f32 %v700, %v868
        %v877 = vadd.f32 %v701, %v873
        %v878 = vld [vmem:[#allocation2 + $0x72] ss:$0 sm:$0xff]
        %v879 = vld [vmem:[#allocation2 + $0x73] ss:$0 sm:$0xff]
        %v880 = vsel %vm337, %v876, 0.0
        %881 = vadd.xlane.f32.xlu0 %v880
        %v882 = vpop.xlane.xlu0 %881
        %v883 = vsel %vm337, %v877, 0.0
        %884 = vadd.xlane.f32.xlu0 %v883
        %v885 = vpop.xlane.xlu0 %884
        %v886 = vmul.f32 %v882, %v671
        %v887 = vmul.f32 %v885, %v671
        %v888 = vmul.f32 %v876, %v876
        %v889 = vmul.f32 %v877, %v877
        %v890 = vsel %vm337, %v888, 0.0
        %891 = vadd.xlane.f32.xlu0 %v890
        %v892 = vpop.xlane.xlu0 %891
        %v893 = vsel %vm337, %v889, 0.0
        %894 = vadd.xlane.f32.xlu0 %v893
        %v895 = vpop.xlane.xlu0 %894
        %v896 = vmul.f32 %v892, %v671
        %v897 = vmul.f32 %v895, %v671
        %v898 = vmul.f32 %v886, %v886
        %v899 = vmul.f32 %v887, %v887
        %v900 = vsub.f32 %v896, %v898
        %v901 = vsub.f32 %v897, %v899
        %v902 = vmax.f32 %v900, 0.0
        %v903 = vmax.f32 %v901, 0.0
        %v904 = vsub.f32 %v876, %v886
        %v905 = vsub.f32 %v877, %v887
        %v906 = vadd.f32 %v902, 1e-05
        %v907 = vadd.f32 %v903, 1e-05
        %v908 = vrsqrt.pop %v906
        %v909 = vrsqrt.pop %v907
        %v910 = vmul.f32 %v904, %v908
        %v911 = vmul.f32 %v905, %v909
        %v912 = vmul.f32 %v910, %v878
        %v913 = vmul.f32 %v911, %v878
        %v914 = vadd.f32 %v912, %v879
        %v915 = vadd.f32 %v913, %v879
        %v916 = vld [vmem:[#allocation2 + $0x20] sm:$0xff]
        %v917 = vld [vmem:[#allocation2 + $0x58] sm:$0xff]
        %v918 = vld [vmem:[#allocation2 + $0x90] sm:$0xff]
        %v919 = vld [vmem:[#allocation2 + $0xc8] sm:$0xff]
        %v920 = vld [vmem:[#allocation2 + $0x74] ss:$0 sm:$0xff]
        %v923 = vrot.slane %v914, 7
        %v924 = vrot.slane %v915, 6
        %vm925 = vcmask 1041409
        %v926 = vsel %vm925, %v924, %v923
        %v927 = vsel %vm337, %v926, 0
        %929 = vmatprep.subr.mxu0 0.0
        %930 = vmatpush1.msra.mxu0 %v916
        %931 = vmatprep.subr.mxu0 0.0
        %932 = vmatpush1.msra.mxu0 %v917
        %933 = vmatprep.subr.mxu0 0.0
        %934 = vmatpush1.msra.mxu0 %v918
        %935 = vmatprep.subr.mxu0 0.0
        %936 = vmatpush1.msra.mxu0 %v919
        %937 = vmatprep.subr.mxu0 0.0
        %938 = vmatpush1.msra.mxu0 0.0
        %939 = vmatprep.subr.mxu0 0.0
        %940 = vmatpush1.msra.mxu0 0.0
        %941 = vmatprep.subr.mxu0 0.0
        %942 = vmatpush1.msra.mxu0 0.0
        %943 = vmatprep.subr.mxu0 0.0
        %944 = vmatpush1.msra.mxu0 0.0
        %945 = vmatprep.subr.mxu0 0.0
        %946 = vmatpush1.msra.mxu0 0.0
        %947 = vmatprep.subr.mxu0 0.0
        %948 = vmatpush1.msra.mxu0 0.0
        %949 = vmatprep.subr.mxu0 0.0
        %950 = vmatpush1.msra.mxu0 0.0
        %951 = vmatprep.subr.mxu0 0.0
        %952 = vmatpush1.msra.mxu0 0.0
        %953 = vmatprep.subr.mxu0 0.0
        %954 = vmatpush1.msra.mxu0 0.0
        %955 = vmatprep.subr.mxu0 0.0
        %956 = vmatpush1.msra.mxu0 0.0
        %957 = vmatprep.subr.mxu0 0.0
        %958 = vmatpush1.msra.mxu0 0.0
        %959 = vmatprep.subr.mxu0 0.0
        %960 = vmatpush1.msra.mxu0 0.0
        %961 = vmatprep.subr.mxu0 0.0
        %962 = vmatpush1.msra.mxu0 0.0
        %963 = vmatprep.subr.mxu0 0.0
        %964 = vmatpush1.msra.mxu0 0.0
        %965 = vmatprep.subr.mxu0 0.0
        %966 = vmatpush1.msra.mxu0 0.0
        %967 = vmatprep.subr.mxu0 0.0
        %968 = vmatpush1.msra.mxu0 0.0
        %969 = vmatprep.subr.mxu0 0.0
        %970 = vmatpush1.msra.mxu0 0.0
        %971 = vmatprep.subr.mxu0 0.0
        %972 = vmatpush1.msra.mxu0 0.0
        %973 = vmatprep.subr.mxu0 0.0
        %974 = vmatpush1.msra.mxu0 0.0
        %975 = vmatprep.subr.mxu0 0.0
        %976 = vmatpush1.msra.mxu0 0.0
        %977 = vmatprep.subr.mxu0 0.0
        %978 = vmatpush1.msra.mxu0 0.0
        %979 = vmatprep.subr.mxu0 0.0
        %980 = vmatpush1.msra.mxu0 0.0
        %981 = vmatprep.subr.mxu0 0.0
        %982 = vmatpush1.msra.mxu0 0.0
        %983 = vmatprep.subr.mxu0 0.0
        %984 = vmatpush1.msra.mxu0 0.0
        %985 = vmatprep.subr.mxu0 0.0
        %986 = vmatpush1.msra.mxu0 0.0
        %987 = vmatprep.subr.mxu0 0.0
        %988 = vmatpush1.msra.mxu0 0.0
        %989 = vmatprep.subr.mxu0 0.0
        %990 = vmatpush1.msra.mxu0 0.0
        %991 = vmatprep.subr.mxu0 0.0
        %992 = vmatpush1.msra.mxu0 0.0
        %993 = vmatprep.mubr.f32.mxu0 0.0
        %994 = vmatmul.mubr.f32.gmra.mrb[0].mxu0 %v927
        %v995 = vpop.f32.mrb[0].mxu0
        %v996 = vadd.f32 %v920, %v995
        %v997 = vpop.f32.mrb[0].mxu0
        %998 = vdwg.mxu0
        %999 = vst [vmem:[%s151] sm:$0x3] %v996
        %s1000 = sand.u32 %s72, 1
        %s1001 = scalar_lea.sflag [#allocation4], %s1000
        %s1002 = sand.u32 %s72, 1
        %s1003 = smul.addr %s1002, 2
        %s1004 = scalar_lea.vmem [#allocation5], %s1003
        // Predicated region
        $region33: #{robformer_forward_batched.1} parent=27 // pred_check
          %p1005 = pneg %p82
        $region34: #{robformer_forward_batched.1} parent=27 // pred_check_branch
          %1007 = sbr.rel (%p1005) target = $region36
        $region35: #{robformer_forward_batched.1} parent=27 // pred_region
          %s1009 = ssub.s32 32, 32
          %1010 = vsyncadd %s1001, %s1009
          %s1011 = smul.addr %s17, 32
          %s1012 = scalar_lea.hbm %s2, %s1011
          %s1014 = sshll.u32 %s1004, 4
          %s1015 = int_to_ptr.vmem [resolvable:$true] %s1014
          %1017 = dma.vmem_to_hbm [thread:$0]  %s1015, 32, %s1012, %s1001
        $region36: #{robformer_forward_batched.1} parent=27 // pred_fallthru
          _
      $region28: #{robformer_forward_batched.1} parent=5 // pred_fallthru
        _
      %p1018 = scmp.le.s32.totalorder 2, %s12
      // Predicated region
      $region37: #{robformer_forward_batched.1} parent=5 // pred_check
        %p1019 = pneg %p1018
      $region38: #{robformer_forward_batched.1} parent=5 // pred_check_branch
        %1021 = sbr.rel (%p1019) target = $region40
      $region39: #{robformer_forward_batched.1} parent=5 // pred_region
        %s1022 = ssub.s32 %s12, 2
        // Predicated region
        $region41: #{robformer_forward_batched.1} parent=39 // pred_check
          %p1023 = pneg %p88
        $region42: #{robformer_forward_batched.1} parent=39 // pred_check_branch
          %1025 = sbr.rel (%p1023) target = $region44
        $region43: #{robformer_forward_batched.1} parent=39 // pred_region
          %s1026 = sand.u32 %s73, 1
          %s1027 = scalar_lea.sflag [#allocation4], %s1026
          %s1028 = sand.u32 %s73, 1
          %s1029 = smul.addr %s1028, 2
          %s1030 = scalar_lea.vmem [#allocation5], %s1029
          %1031 = dma.done %s1027, 32
        $region44: #{robformer_forward_batched.1} parent=39 // pred_fallthru
          _
      $region40: #{robformer_forward_batched.1} parent=5 // pred_fallthru
        _
    $region6: #{robformer_forward_batched.1} parent=1 // loop_footer
      %s16 = sadd.s32 1, %s12
    $region7: #{robformer_forward_batched.1} parent=1 // loop_footer_branch
      %11 = sbr.rel target = $region3
    $region8: #{robformer_forward_batched.1} parent=1 // loop_exit
      _
    %1032 = vsyncpa [#allocation3], 1
    %s1033 = scalar_lea.sflag [#allocation3], 1
    %1034 = vsyncpa %s1033, 1
    %1035 = vsyncpa [#allocation4], 1
    %s1036 = scalar_lea.sflag [#allocation4], 1
    %1037 = vsyncpa %s1036, 1

</llo_original>
